<compile_context>
chip_gen: v7x
topology: tpu7x:2x2x1
jax: 0.10.0
libtpu: 0.0.40
codegen_flags: <defaults>
</compile_context>

<pallas_src>
import math

import jax
import jax.numpy as jnp
from jax.experimental import pallas as pl
from jax.experimental.pallas import tpu as pltpu

_LANE = 128
_SUBLANE = 8

# GELU(tanh approx) in logistic form:
#   0.5*x*(1 + tanh(z)) == x * sigmoid(2*z),  z = sqrt(2/pi)*(x + 0.044715*x^3)
# We directly build -2*z so the kernel needs no extra negation:
#   y = x / (1 + exp(_NK1*x + _NK3*x^3))
_NK1 = -2.0 * math.sqrt(2.0 / math.pi)
_NK3 = -2.0 * math.sqrt(2.0 / math.pi) * 0.044715

# ~4 MiB of I/O per block; input+output double-buffered => ~16 MiB pipelined VMEM.
_TARGET_BLOCK_BYTES = 4 * 1024 * 1024
# Explicit scoped-VMEM limit (default is only 16 MiB on v5e; 32 MiB fits all gens,
# including v7x's 64 MiB physical VMEM with headroom).
_VMEM_LIMIT_BYTES = 32 * 1024 * 1024


def _gelu_kernel(x_ref, o_ref):
    # I/O stays in the native dtype; math in f32 (v5e VPU/EUP have no bf16 path).
    xf = x_ref[...].astype(jnp.float32)
    x2 = xf * xf
    e = jnp.exp(xf * (_NK1 + _NK3 * x2))      # exp(-2z), Horner form, EUP slot
    o_ref[...] = (xf / (1.0 + e)).astype(o_ref.dtype)


def _dimension_semantics():
    """CORE_PARALLEL on v7x (2 independent TensorCores), 'parallel' elsewhere."""
    try:
        kind = jax.devices()[0].device_kind.lower()
    except Exception:  # pragma: no cover - defensive
        kind = ""
    if "v7" in kind or "7x" in kind:
        return (pltpu.CORE_PARALLEL,)
    return ("parallel",)


def _block_rows(rows, cols, itemsize, target_bytes):
    tr = max(1, target_bytes // (cols * itemsize))
    tr = max(_SUBLANE, (tr // _SUBLANE) * _SUBLANE)   # sublane-aligned
    return rows if tr >= rows else tr


def _gelu_2d(x2d, tr, donate):
    rows, cols = x2d.shape
    grid_r = pl.cdiv(rows, tr)
    return pl.pallas_call(
        _gelu_kernel,
        out_shape=jax.ShapeDtypeStruct((rows, cols), x2d.dtype),
        grid=(grid_r,),
        in_specs=[pl.BlockSpec((tr, cols), lambda i: (i, 0))],
        out_specs=pl.BlockSpec((tr, cols), lambda i: (i, 0)),
        input_output_aliases={0: 0} if donate else {},
        compiler_params=pltpu.CompilerParams(
            dimension_semantics=_dimension_semantics(),
            vmem_limit_bytes=_VMEM_LIMIT_BYTES,
        ),
    )(x2d)


def gelu_pallas(x: jax.Array, *, target_block_bytes: int = _TARGET_BLOCK_BYTES,
                donate_input: bool = False) -> jax.Array:
    """Elementwise GELU (tanh approx), matching the PyTorch module's forward."""
    orig_shape = x.shape
    dtype = x.dtype
    n = x.size
    if n == 0:
        return x
    itemsize = jnp.dtype(dtype).itemsize

    # ---- Pick a zero-copy lane-dense 2-D view when possible. ---------------
    cols = None
    if (x.ndim >= 2 and x.shape[-1] % _LANE == 0
            and x.shape[-1] * itemsize <= target_block_bytes):
        cols = x.shape[-1]                       # keep the (wide) last dim
    elif n % _LANE == 0:
        for c in (1024, 512, 256, _LANE):        # widest lane-dense width that fits
            if n % c == 0 and c * itemsize <= target_block_bytes:
                cols = c
                break

    if cols is not None:
        x2d = x.reshape(-1, cols)
        rows = x2d.shape[0]
        tr = _block_rows(rows, cols, itemsize, target_block_bytes)
        return _gelu_2d(x2d, tr, donate_input).reshape(orig_shape)

    # ---- Ragged sizes. ------------------------------------------------------
    if n * itemsize <= target_block_bytes:
        # Single full-extent (1, n) block: legal for any n, zero extra copies.
        out = _gelu_2d(x.reshape(1, n), 1, donate_input)
        return out.reshape(orig_shape)

    # TODO(synk): large ragged sizes still pad+slice (extra in/out copy); a
    # masked final block (scalar n in SMEM + pltpu.store mask) would avoid it.
    tile = _SUBLANE * _LANE
    n_pad = pl.cdiv(n, tile) * tile
    cols = tile
    xp = jnp.pad(x.reshape(-1), (0, n_pad - n)).reshape(-1, cols)
    rows = xp.shape[0]
    tr = _block_rows(rows, cols, itemsize, target_block_bytes)
    out = _gelu_2d(xp, tr, False)
    return out.reshape(-1)[:n].reshape(orig_shape)


def gelu_ref(x: jax.Array) -> jax.Array:
    """Pure-JAX reference: the module's tanh-form formula, f32 math."""
    xf = x.astype(jnp.float32)
    y = 0.5 * xf * (1.0 + jnp.tanh(math.sqrt(2.0 / math.pi)
                                   * (xf + 0.044715 * xf ** 3)))
    return y.astype(x.dtype)


if __name__ == "__main__":
    key = jax.random.PRNGKey(0)
    k1, k2, k3 = jax.random.split(key, 3)

    # 1) f32, feed-forward-like shape (batch=2, seq=8, hidden=32).
    x = jax.random.normal(k1, (2, 8, 32), dtype=jnp.float32)
    y = jax.block_until_ready(gelu_pallas(x))
    assert y.shape == x.shape and y.dtype == x.dtype
    assert jnp.allclose(y, gelu_ref(x), atol=1e-5, rtol=1e-5), "f32 mismatch"

    # 2) bf16, lane-dense last dim (zero-copy wide-lane fast path).
    xb = jax.random.normal(k2, (2, 8, 256), dtype=jnp.bfloat16)
    yb = jax.block_until_ready(gelu_pallas(xb))
    assert yb.shape == xb.shape and yb.dtype == xb.dtype
    assert jnp.allclose(yb.astype(jnp.float32),
                        gelu_ref(xb).astype(jnp.float32),
                        atol=2e-2, rtol=2e-2), "bf16 mismatch"

    # 3) Ragged small input (the chapter's x = arange(len(vocab))):
    #    single zero-copy full-extent block, no pad/slice round-trip.
    xr = jnp.arange(9, dtype=jnp.float32)
    yr = jax.block_until_ready(gelu_pallas(xr))
    assert jnp.allclose(yr, gelu_ref(xr), atol=1e-5, rtol=1e-5), "ragged mismatch"

    # 4) Exercise the multi-block pipelined grid path with a tiny block override.
    xg = jax.random.normal(k3, (64, 256), dtype=jnp.float32)
    yg = jax.block_until_ready(gelu_pallas(xg, target_block_bytes=16 * 1024))
    assert jnp.allclose(yg, gelu_ref(xg), atol=1e-5, rtol=1e-5), "grid mismatch"

    print("KERNEL_OK")
</pallas_src>

<mosaic_0001>
module attributes {stable_mosaic.version = 11 : i64} {
  func.func @_gelu_kernel(%arg0: i32, %arg1: memref<1x512xf32, #tpu.memory_space<vmem>>, %arg2: memref<1x512xf32, #tpu.memory_space<vmem>>) attributes {dimension_semantics = [#tpu.dimension_semantics<parallel>], iteration_bounds = array<i64: 1>, scalar_prefetch = 0 : i64, scratch_operands = 0 : i64, tpu.core_type = #tpu.core_type<tc>, window_params = [{transform_indices = @transform_0, window_bounds = array<i64: 1, 512>}, {transform_indices = @transform_1, window_bounds = array<i64: 1, 512>}]} {
    %c0 = arith.constant 0 : index
    %c0_0 = arith.constant 0 : index
    %0 = vector.load %arg1[%c0, %c0_0] : memref<1x512xf32, #tpu.memory_space<vmem>>, vector<1x512xf32>
    %1 = arith.mulf %0, %0 : vector<1x512xf32>
    %cst = arith.constant -0.0713548139 : f32
    %2 = vector.broadcast %cst : f32 to vector<1x512xf32>
    %3 = arith.mulf %2, %1 : vector<1x512xf32>
    %cst_1 = arith.constant -1.59576917 : f32
    %4 = vector.broadcast %cst_1 : f32 to vector<1x512xf32>
    %5 = arith.addf %4, %3 : vector<1x512xf32>
    %6 = arith.mulf %0, %5 : vector<1x512xf32>
    %7 = math.exp %6 : vector<1x512xf32>
    %cst_2 = arith.constant 1.000000e+00 : f32
    %8 = vector.broadcast %cst_2 : f32 to vector<1x512xf32>
    %9 = arith.addf %8, %7 : vector<1x512xf32>
    %10 = arith.divf %0, %9 : vector<1x512xf32>
    %c0_3 = arith.constant 0 : index
    %c0_4 = arith.constant 0 : index
    %11 = vector.load %arg2[%c0_3, %c0_4] : memref<1x512xf32, #tpu.memory_space<vmem>>, vector<1x512xf32>
    tpu.vector_store %arg2[%c0_3, %c0_4], %10 {strides = array<i32>} : memref<1x512xf32, #tpu.memory_space<vmem>>, vector<1x512xf32>,
    return
  }
  func.func @transform_0(%arg0: i32) -> (i32, i32) {
    %c0_i32 = arith.constant 0 : i32
    %c0_i32_0 = arith.constant 0 : i32
    return %arg0, %c0_i32 : i32, i32
  }
  func.func @transform_1(%arg0: i32) -> (i32, i32) {
    %c0_i32 = arith.constant 0 : i32
    %c0_i32_0 = arith.constant 0 : i32
    return %arg0, %c0_i32 : i32, i32
  }
}

</mosaic_0001>

<llo_original>
// kernel: tpu_custom_call.1
$region0: #{tpu_custom_call.1}
  #allocation0 [shape = 'u32[]', space=smem, size = 0x4, offset = 0x4, fixed_abs, tag = 'smem constant byte address 0x4 - core index']
  #allocation1 [shape = 'u32[144,128]{1,0:T(1,128)}', space=vmem, size = 0x12000, scoped, tag = 'internal scratch']
  %s0 = inlined_call_operand.hbm [shape: f32[1,512], index: 0, kind: input, shape index: {}]
  %s1 = inlined_call_operand.hbm [shape: f32[1,512], index: 1, kind: output, shape index: {}]
  %s2 = sld [smem:[#allocation0]]
  $region18: #{tpu_custom_call.1} parent=0
    _
  %s4 = ssub.s32 1, %s2
  %s5 = scalar_select 0, %s4, %s2
  $region1: #{tpu_custom_call.1} parent=0
    #allocation2 [shape = 'u8[2048]{0}', space=vmem, size = 0x800, scoped, tag = 'input window, operand 0, single buffered']
    #allocation3 [shape = 's32[1]{0}', space=sflag, size = 0x4, scoped, tag = 'scoped memory for tpu_custom_call.1']
    #allocation4 [shape = 's32[1]{0}', space=sflag, size = 0x4, scoped, tag = 'scoped memory for tpu_custom_call.1']
    #allocation5 [shape = 'u8[2048]{0}', space=vmem, size = 0x800, scoped, tag = 'output window, operand 0, single buffered']
    %6 = vsyncpa [#allocation3], 0
    %7 = vsyncpa [#allocation4], 0
    // Predicated region
    $region2: #{tpu_custom_call.1} parent=1 // pred_check
      _
    $region3: #{tpu_custom_call.1} parent=1 // pred_check_branch
      %9 = sbr.rel (0) target = $region5
    $region4: #{tpu_custom_call.1} parent=1 // pred_region
      %s11 = ssub.s32 64, 64
      %12 = vsyncadd [#allocation3], %s11
      %s14 = sshll.u32 [#allocation2], 4
      %s15 = int_to_ptr.vmem [resolvable:$true] %s14
      %17 = dma.hbm_to_vmem [thread:$0]  %s0, 64, %s15, [#allocation3]
    $region5: #{tpu_custom_call.1} parent=1 // pred_fallthru
      _
    // Predicated region
    $region6: #{tpu_custom_call.1} parent=1 // pred_check
      _
    $region7: #{tpu_custom_call.1} parent=1 // pred_check_branch
      %19 = sbr.rel (0) target = $region9
    $region8: #{tpu_custom_call.1} parent=1 // pred_region
      %20 = dma.done [#allocation3], 64
    $region9: #{tpu_custom_call.1} parent=1 // pred_fallthru
      _
    %v21 = vld [vmem:[#allocation2] sm:$0xf]
    %v22 = vmul.f32 %v21, %v21
    %v23 = vmul.f32 %v22, -0.071354814
    %v24 = vadd.f32 %v23, -1.5957692
    %v25 = vmul.f32 %v21, %v24
    %v26 = vmul.f32 %v25, 1.442695
    %v27 = vpow.pop %v26
    %v28 = vadd.f32 %v27, 1.0
    %v29 = vrcp.pop %v28
    %v30 = vmul.f32 %v21, %v29
    %v31 = vlaneseq
    %vm32 = vcmp.ge.s32.totalorder %v31, 0
    %vm33 = vcmp.lt.s32.totalorder %v31, 512
    %vm34 = vmand %vm32, %vm33
    %35 = vst.msk [vmem:[#allocation5] sm:$0xf] %vm34, %v30
    // Predicated region
    $region10: #{tpu_custom_call.1} parent=1 // pred_check
      _
    $region11: #{tpu_custom_call.1} parent=1 // pred_check_branch
      %37 = sbr.rel (0) target = $region13
    $region12: #{tpu_custom_call.1} parent=1 // pred_region
      %s39 = ssub.s32 64, 64
      %40 = vsyncadd [#allocation4], %s39
      %s42 = sshll.u32 [#allocation5], 4
      %s43 = int_to_ptr.vmem [resolvable:$true] %s42
      %45 = dma.vmem_to_hbm [thread:$0]  %s43, 64, %s1, [#allocation4]
    $region13: #{tpu_custom_call.1} parent=1 // pred_fallthru
      _
    // Predicated region
    $region14: #{tpu_custom_call.1} parent=1 // pred_check
      _
    $region15: #{tpu_custom_call.1} parent=1 // pred_check_branch
      %47 = sbr.rel (0) target = $region17
    $region16: #{tpu_custom_call.1} parent=1 // pred_region
      %48 = dma.done [#allocation4], 64
    $region17: #{tpu_custom_call.1} parent=1 // pred_fallthru
      _
    %49 = vsyncpa [#allocation3], 1
    %50 = vsyncpa [#allocation4], 1

</llo_original>
